<compile_context>
chip_gen: v5e
topology: v5e:2x2
jax: 0.10.0
libtpu: 0.0.40
codegen_flags: <defaults>
</compile_context>

<pallas_src>
import functools

import jax
import jax.numpy as jnp
from jax.experimental import pallas as pl
from jax.experimental.pallas import tpu as pltpu

_LANES = 128
_SUBLANES = 8


def _snr_partial_kernel(x_ref, sum_ref, max_ref, *, tm, n_j, n_valid, needs_mask):
    """Accumulate per-partition (8,128) partial sum / partial max."""
    j = pl.program_id(1)

    @pl.when(j == 0)
    def _():
        sum_ref[...] = jnp.zeros_like(sum_ref)
        max_ref[...] = jnp.full_like(max_ref, -jnp.inf)

    blk = x_ref[...].astype(jnp.float32)          # (tm, 128)

    if needs_mask:
        # Padded tail elements are 0 (identity for the sum) but must be
        # excluded from the max: mask them to -inf.  Compare (row, col) against
        # the last valid position instead of a flat index (no int32 overflow).
        p = pl.program_id(0)
        row0 = (p * n_j + j) * tm
        rows = jax.lax.broadcasted_iota(jnp.int32, (tm, _LANES), 0) + row0
        cols = jax.lax.broadcasted_iota(jnp.int32, (tm, _LANES), 1)
        full_rows = n_valid // _LANES             # rows entirely valid
        rem = n_valid % _LANES                    # valid lanes in the next row
        valid = (rows < full_rows) | ((rows == full_rows) & (cols < rem))
        blk_max = jnp.where(valid, blk, -jnp.inf)
    else:
        blk_max = blk

    # (tm,128) -> (tm//8, 8, 128): tile-aligned relabeling; the reduction over
    # the leading axis is pure elementwise VALU work (no per-step XLU reduce).
    blk3 = blk.reshape(tm // _SUBLANES, _SUBLANES, _LANES)
    blk3_max = blk_max.reshape(tm // _SUBLANES, _SUBLANES, _LANES)
    sum_ref[...] = sum_ref[...] + blk3.sum(axis=0)[None]
    max_ref[...] = jnp.maximum(max_ref[...], blk3_max.max(axis=0)[None])


def snr_loss(x, weight: float, *, tile_rows: int = 8192, num_partitions: int = 2):
    """SNRLoss.forward for arbitrary-shape `x`; the reduction is global."""
    if weight == 0:
        # TODO(synk): PyTorch returns the Python int 0 here; we return a
        # jnp scalar 0.0 for JAX-friendliness.
        return jnp.float32(0.0)

    n_total = int(x.size)

    # Rows of 128 lanes needed to cover the flattened tensor.
    m = -(-n_total // _LANES)
    # Tile rows: multiple of 8, capped so tiny inputs don't over-pad.
    tm = min(int(tile_rows), -(-m // _SUBLANES) * _SUBLANES)
    tm = max(_SUBLANES, (tm // _SUBLANES) * _SUBLANES)

    n_blocks = -(-m // tm)
    p_parts = max(1, min(int(num_partitions), n_blocks))
    n_blocks = -(-n_blocks // p_parts) * p_parts      # divisible by partitions
    n_j = n_blocks // p_parts
    m_padded = n_blocks * tm
    n_padded = m_padded * _LANES

    x_flat = x.reshape(-1)
    needs_mask = n_padded != n_total
    if needs_mask:
        # Zero padding: identity for the sum; masked to -inf for the max in-kernel.
        x_flat = jnp.pad(x_flat, (0, n_padded - n_total))
    x2d = x_flat.reshape(m_padded, _LANES)

    kernel = functools.partial(
        _snr_partial_kernel,
        tm=tm, n_j=n_j, n_valid=n_total, needs_mask=needs_mask,
    )

    bytes_in = n_padded * x.dtype.itemsize
    psum, pmax = pl.pallas_call(
        kernel,
        out_shape=(
            jax.ShapeDtypeStruct((p_parts, _SUBLANES, _LANES), jnp.float32),
            jax.ShapeDtypeStruct((p_parts, _SUBLANES, _LANES), jnp.float32),
        ),
        grid_spec=pltpu.PrefetchScalarGridSpec(
            num_scalar_prefetch=0,
            grid=(p_parts, n_j),
            in_specs=[
                pl.BlockSpec((tm, _LANES), lambda p, j: (p * n_j + j, 0)),
            ],
            out_specs=[
                pl.BlockSpec((1, _SUBLANES, _LANES), lambda p, j: (p, 0, 0)),
                pl.BlockSpec((1, _SUBLANES, _LANES), lambda p, j: (p, 0, 0)),
            ],
        ),
        compiler_params=pltpu.CompilerParams(
            dimension_semantics=("parallel", "arbitrary"),
            vmem_limit_bytes=32 * 1024 * 1024,
        ),
        cost_estimate=pl.CostEstimate(
            flops=2 * n_total,
            transcendentals=0,
            bytes_accessed=bytes_in + 2 * p_parts * _SUBLANES * _LANES * 4,
        ),
    )(x2d)

    # Tiny epilogue (a few XLA ops on (P,8,128) partials + scalar math).
    total_sum = jnp.sum(psum)
    total_max = jnp.max(pmax)
    mean = total_sum / jnp.float32(n_total)
    contrast = (total_max - mean) / (mean + 1e-6)
    return jnp.exp(-contrast / jnp.float32(weight))


if __name__ == "__main__":
    key = jax.random.PRNGKey(0)
    k_target, k_x, k_odd = jax.random.split(key, 3)

    # __init__ params (deterministic, synthetic):
    #   target: only used for target_contrast, which is unused in forward()
    #   weight: scalar
    target = jax.random.uniform(k_target, (2, 4, 16, 16), dtype=jnp.float32) + 0.5
    weight = 0.5
    target_contrast = (target.max() - target.mean()) / target.mean()  # parity with __init__

    # forward input, NCHW
    x = jax.random.uniform(k_x, (2, 4, 16, 16), dtype=jnp.float32) + 0.1

    loss = snr_loss(x, weight)
    loss = jax.block_until_ready(loss)

    # pure-JAX reference check
    lq = x.mean()
    uq = x.max()
    ref = jnp.exp(-((uq - lq) / (lq + 1e-6)) / weight)
    assert jnp.allclose(loss, ref, rtol=1e-5, atol=1e-6), (loss, ref)

    # weight == 0 branch
    assert snr_loss(x, 0.0) == 0.0

    # unaligned shape + all-negative values: exercises padding + max masking
    x_odd = -jax.random.uniform(k_odd, (2, 3, 5, 7), dtype=jnp.float32) - 0.1
    loss_odd = jax.block_until_ready(snr_loss(x_odd, weight))
    lq_o = x_odd.mean()
    uq_o = x_odd.max()
    ref_odd = jnp.exp(-((uq_o - lq_o) / (lq_o + 1e-6)) / weight)
    assert jnp.allclose(loss_odd, ref_odd, rtol=1e-5, atol=1e-6), (loss_odd, ref_odd)

    print("KERNEL_OK")
</pallas_src>

<mosaic_0001>
module attributes {stable_mosaic.version = 11 : i64} {
  func.func @_snr_partial_kernel(%arg0: i32, %arg1: i32, %arg2: memref<16x128xf32, #tpu.memory_space<vmem>>, %arg3: memref<1x8x128xf32, #tpu.memory_space<vmem>>, %arg4: memref<1x8x128xf32, #tpu.memory_space<vmem>>) attributes {dimension_semantics = [#tpu.dimension_semantics<parallel>, #tpu.dimension_semantics<arbitrary>], iteration_bounds = array<i64: 1, 1>, scalar_prefetch = 0 : i64, scratch_operands = 0 : i64, tpu.core_type = #tpu.core_type<tc>, window_params = [{transform_indices = @transform_0, window_bounds = array<i64: 16, 128>}, {transform_indices = @transform_1, window_bounds = array<i64: 1, 8, 128>}, {transform_indices = @transform_2, window_bounds = array<i64: 1, 8, 128>}]} {
    %c0_i32 = arith.constant 0 : i32
    %0 = arith.cmpi eq, %arg1, %c0_i32 : i32
    %1 = arith.extui %0 : i1 to i32
    %c0_i32_0 = arith.constant 0 : i32
    %2 = arith.cmpi ne, %1, %c0_i32_0 : i32
    scf.if %2 {
      %cst_15 = arith.constant 0.000000e+00 : f32
      %16 = vector.broadcast %cst_15 : f32 to vector<1x8x128xf32>
      %c0_16 = arith.constant 0 : index
      %c0_17 = arith.constant 0 : index
      %c0_18 = arith.constant 0 : index
      %17 = vector.load %arg3[%c0_16, %c0_17, %c0_18] : memref<1x8x128xf32, #tpu.memory_space<vmem>>, vector<1x8x128xf32>
      tpu.vector_store %arg3[%c0_16, %c0_17, %c0_18], %16 {strides = array<i32>} : memref<1x8x128xf32, #tpu.memory_space<vmem>>, vector<1x8x128xf32>,
      %cst_19 = arith.constant 0xFF800000 : f32
      %18 = vector.broadcast %cst_19 : f32 to vector<1x8x128xf32>
      %c0_20 = arith.constant 0 : index
      %c0_21 = arith.constant 0 : index
      %c0_22 = arith.constant 0 : index
      %19 = vector.load %arg4[%c0_20, %c0_21, %c0_22] : memref<1x8x128xf32, #tpu.memory_space<vmem>>, vector<1x8x128xf32>
      tpu.vector_store %arg4[%c0_20, %c0_21, %c0_22], %18 {strides = array<i32>} : memref<1x8x128xf32, #tpu.memory_space<vmem>>, vector<1x8x128xf32>,
    } else {
    }
    %c0 = arith.constant 0 : index
    %c0_1 = arith.constant 0 : index
    %3 = vector.load %arg2[%c0, %c0_1] : memref<16x128xf32, #tpu.memory_space<vmem>>, vector<16x128xf32>
    %4 = vector.shape_cast %3 : vector<16x128xf32> to vector<2x8x128xf32>
    %5 = vector.shape_cast %3 : vector<16x128xf32> to vector<2x8x128xf32>
    %c0_2 = arith.constant 0 : index
    %c0_3 = arith.constant 0 : index
    %c0_4 = arith.constant 0 : index
    %6 = vector.load %arg3[%c0_2, %c0_3, %c0_4] : memref<1x8x128xf32, #tpu.memory_space<vmem>>, vector<1x8x128xf32>
    %cst = arith.constant dense<0.000000e+00> : vector<8x128xf32>
    %7 = vector.multi_reduction <add>, %4, %cst [0] : vector<2x8x128xf32> to vector<8x128xf32>
    %8 = vector.shape_cast %7 : vector<8x128xf32> to vector<1x8x128xf32>
    %9 = arith.addf %6, %8 : vector<1x8x128xf32>
    %c0_5 = arith.constant 0 : index
    %c0_6 = arith.constant 0 : index
    %c0_7 = arith.constant 0 : index
    %10 = vector.load %arg3[%c0_5, %c0_6, %c0_7] : memref<1x8x128xf32, #tpu.memory_space<vmem>>, vector<1x8x128xf32>
    tpu.vector_store %arg3[%c0_5, %c0_6, %c0_7], %9 {strides = array<i32>} : memref<1x8x128xf32, #tpu.memory_space<vmem>>, vector<1x8x128xf32>,
    %c0_8 = arith.constant 0 : index
    %c0_9 = arith.constant 0 : index
    %c0_10 = arith.constant 0 : index
    %11 = vector.load %arg4[%c0_8, %c0_9, %c0_10] : memref<1x8x128xf32, #tpu.memory_space<vmem>>, vector<1x8x128xf32>
    %cst_11 = arith.constant dense<0xFF800000> : vector<8x128xf32>
    %12 = vector.multi_reduction <maximumf>, %5, %cst_11 [0] : vector<2x8x128xf32> to vector<8x128xf32>
    %13 = vector.shape_cast %12 : vector<8x128xf32> to vector<1x8x128xf32>
    %14 = arith.maximumf %11, %13 : vector<1x8x128xf32>
    %c0_12 = arith.constant 0 : index
    %c0_13 = arith.constant 0 : index
    %c0_14 = arith.constant 0 : index
    %15 = vector.load %arg4[%c0_12, %c0_13, %c0_14] : memref<1x8x128xf32, #tpu.memory_space<vmem>>, vector<1x8x128xf32>
    tpu.vector_store %arg4[%c0_12, %c0_13, %c0_14], %14 {strides = array<i32>} : memref<1x8x128xf32, #tpu.memory_space<vmem>>, vector<1x8x128xf32>,
    return
  }
  func.func @transform_0(%arg0: i32, %arg1: i32) -> (i32, i32) {
    %c1_i32 = arith.constant 1 : i32
    %0 = arith.muli %arg0, %c1_i32 : i32
    %1 = arith.addi %0, %arg1 : i32
    %c0_i32 = arith.constant 0 : i32
    %c0_i32_0 = arith.constant 0 : i32
    return %1, %c0_i32 : i32, i32
  }
  func.func @transform_1(%arg0: i32, %arg1: i32) -> (i32, i32, i32) {
    %c0_i32 = arith.constant 0 : i32
    %c0_i32_0 = arith.constant 0 : i32
    %c0_i32_1 = arith.constant 0 : i32
    return %arg0, %c0_i32, %c0_i32_0 : i32, i32, i32
  }
  func.func @transform_2(%arg0: i32, %arg1: i32) -> (i32, i32, i32) {
    %c0_i32 = arith.constant 0 : i32
    %c0_i32_0 = arith.constant 0 : i32
    %c0_i32_1 = arith.constant 0 : i32
    return %arg0, %c0_i32, %c0_i32_0 : i32, i32, i32
  }
}

</mosaic_0001>

<llo_original>
// kernel: tpu_custom_call.1
$region0: #{tpu_custom_call.1}
  #allocation0 [shape = 'u32[]', space=smem, size = 0x4, offset = 0x4, fixed_abs, tag = 'smem constant byte address 0x4 - core index']
  #allocation1 [shape = 'u32[72,128]{1,0:T(1,128)}', space=vmem, size = 0x9000, scoped, tag = 'internal scratch']
  %s0 = inlined_call_operand.hbm [shape: f32[16,128], index: 0, kind: input, shape index: {}]
  %s1 = inlined_call_operand.hbm [shape: f32[1,8,128], index: 1, kind: output, shape index: {0}]
  %s2 = inlined_call_operand.hbm [shape: f32[1,8,128], index: 2, kind: output, shape index: {1}]
  %3 = xla_tuple %s1, %s2
  %s4 = sld [smem:[#allocation0]]
  $region30: #{tpu_custom_call.1} parent=0
    _
  %s6 = ssub.s32 1, %s4
  %s7 = scalar_select 0, %s6, %s4
  $region1: #{tpu_custom_call.1} parent=0
    #allocation2 [shape = 'u8[8192]{0}', space=vmem, size = 0x2000, scoped, tag = 'input window, operand 0, single buffered']
    #allocation3 [shape = 's32[1]{0}', space=sflag, size = 0x4, scoped, tag = 'scoped memory for tpu_custom_call.1']
    #allocation4 [shape = 's32[1]{0}', space=sflag, size = 0x4, scoped, tag = 'scoped memory for tpu_custom_call.1']
    #allocation5 [shape = 'u8[4096]{0}', space=vmem, size = 0x1000, scoped, tag = 'output window, operand 0, single buffered']
    #allocation6 [shape = 'u8[4096]{0}', space=vmem, size = 0x1000, scoped, tag = 'output window, operand 1, single buffered']
    #allocation7 [shape = 's32[1]{0}', space=sflag, size = 0x4, scoped, tag = 'scoped memory for tpu_custom_call.1']
    %8 = vsyncpa [#allocation3], 0
    %9 = vsyncpa [#allocation4], 0
    %10 = vsyncpa [#allocation7], 0
    // Predicated region
    $region2: #{tpu_custom_call.1} parent=1 // pred_check
      _
    $region3: #{tpu_custom_call.1} parent=1 // pred_check_branch
      %12 = sbr.rel (0) target = $region5
    $region4: #{tpu_custom_call.1} parent=1 // pred_region
      %s13 = sadd.s32 0, 0
      %s14 = smul.u32 2, %s13
      %16 = vsyncadd [#allocation3], 0
      %s17 = smul.addr %s14, 8
      %s18 = scalar_lea.hbm %s0, %s17
      %s19 = sshll.u32 %s18, 4
      %s20 = int_to_ptr.hbm [resolvable:$true] %s19
      %s21 = sshll.u32 [#allocation2], 4
      %s22 = int_to_ptr.vmem [resolvable:$true] %s21
      %27 = dma.hbm_to_vmem [thread:$0]  %s20, 256, %s22, [#allocation3], 128, 128, 8
    $region5: #{tpu_custom_call.1} parent=1 // pred_fallthru
      _
    // Predicated region
    $region6: #{tpu_custom_call.1} parent=1 // pred_check
      _
    $region7: #{tpu_custom_call.1} parent=1 // pred_check_branch
      %29 = sbr.rel (0) target = $region9
    $region8: #{tpu_custom_call.1} parent=1 // pred_region
      %31 = dma.done [#allocation3], 256
    $region9: #{tpu_custom_call.1} parent=1 // pred_fallthru
      _
    %s32 = sadd.s32 0, 0
    %s33 = smul.u32 2, %s32
    %p34 = scmp.eq.s32.totalorder 0, 0
    // Predicated region
    $region10: #{tpu_custom_call.1} parent=1 // pred_check
      %p35 = pneg %p34
    $region11: #{tpu_custom_call.1} parent=1 // pred_check_branch
      %37 = sbr.rel (%p35) target = $region13
    $region12: #{tpu_custom_call.1} parent=1 // pred_region
      %38 = vst [vmem:[#allocation5] sm:$0xff] 0.0
      %39 = vst [vmem:[#allocation6] sm:$0xff] -inf
    $region13: #{tpu_custom_call.1} parent=1 // pred_fallthru
      _
    %v40 = vld [vmem:[#allocation2] sm:$0xff]
    %v41 = vld [vmem:[#allocation2 + $0x8] sm:$0xff]
    %v42 = vld [vmem:[#allocation5] sm:$0xff]
    %v43 = vadd.f32 %v40, %v41
    %v44 = vadd.f32 %v42, %v43
    %45 = vst [vmem:[#allocation5] sm:$0xff] %v44
    %v46 = vld [vmem:[#allocation6] sm:$0xff]
    %v47 = vmax.f32 %v40, %v41
    %v48 = vmax.f32 %v46, %v47
    %49 = vst [vmem:[#allocation6] sm:$0xff] %v48
    // Predicated region
    $region14: #{tpu_custom_call.1} parent=1 // pred_check
      _
    $region15: #{tpu_custom_call.1} parent=1 // pred_check_branch
      %51 = sbr.rel (0) target = $region17
    $region16: #{tpu_custom_call.1} parent=1 // pred_region
      %53 = vsyncadd [#allocation4], 0
      %s55 = sshll.u32 [#allocation5], 4
      %s56 = int_to_ptr.vmem [resolvable:$true] %s55
      %s57 = sshll.u32 %s1, 4
      %s58 = int_to_ptr.hbm [resolvable:$true] %s57
      %60 = dma.vmem_to_hbm [thread:$0]  %s56, 128, %s58, [#allocation4]
    $region17: #{tpu_custom_call.1} parent=1 // pred_fallthru
      _
    // Predicated region
    $region18: #{tpu_custom_call.1} parent=1 // pred_check
      _
    $region19: #{tpu_custom_call.1} parent=1 // pred_check_branch
      %62 = sbr.rel (0) target = $region21
    $region20: #{tpu_custom_call.1} parent=1 // pred_region
      %64 = vsyncadd [#allocation7], 0
      %s66 = sshll.u32 [#allocation6], 4
      %s67 = int_to_ptr.vmem [resolvable:$true] %s66
      %s68 = sshll.u32 %s2, 4
      %s69 = int_to_ptr.hbm [resolvable:$true] %s68
      %71 = dma.vmem_to_hbm [thread:$0]  %s67, 128, %s69, [#allocation7]
    $region21: #{tpu_custom_call.1} parent=1 // pred_fallthru
      _
    // Predicated region
    $region22: #{tpu_custom_call.1} parent=1 // pred_check
      _
    $region23: #{tpu_custom_call.1} parent=1 // pred_check_branch
      %73 = sbr.rel (0) target = $region25
    $region24: #{tpu_custom_call.1} parent=1 // pred_region
      %75 = dma.done [#allocation4], 128
    $region25: #{tpu_custom_call.1} parent=1 // pred_fallthru
      _
    // Predicated region
    $region26: #{tpu_custom_call.1} parent=1 // pred_check
      _
    $region27: #{tpu_custom_call.1} parent=1 // pred_check_branch
      %77 = sbr.rel (0) target = $region29
    $region28: #{tpu_custom_call.1} parent=1 // pred_region
      %79 = dma.done [#allocation7], 128
    $region29: #{tpu_custom_call.1} parent=1 // pred_fallthru
      _
    %80 = vsyncpa [#allocation3], 1
    %81 = vsyncpa [#allocation4], 1
    %82 = vsyncpa [#allocation7], 1

</llo_original>
